<compile_context>
chip_gen: v7x
topology: tpu7x:2x2x1
jax: 0.10.0
libtpu: 0.0.40
codegen_flags: <defaults>
</compile_context>

<pallas_src>
import jax
import jax.numpy as jnp
from jax import lax
from jax.experimental import pallas as pl
from jax.experimental.pallas import tpu as pltpu


def _mlp_kernel(x_ref, w1_ref, b1_ref, w2_ref, b2_ref, o_ref):
    # x_ref:  [TILE_B, d_in]  current batch tile (streamed)
    # w1_ref: [H, d_in]       PyTorch layout, VMEM-resident across the grid
    # b1_ref: [H, 1]
    # w2_ref: [H, 1]
    # b2_ref: [1, 1]
    # o_ref:  [1, TILE_B]     lane-dense output tile
    #
    # hT[h, b] = sum_d w1[h, d] * x[b, d]   (MXU, contract the shared last dim)
    h_t = lax.dot_general(
        w1_ref[...], x_ref[...],
        dimension_numbers=(((1,), (1,)), ((), ())),
        preferred_element_type=jnp.float32,
    )
    h_t = jnp.maximum(h_t + b1_ref[...], 0.0)                    # [H, TILE_B]
    # Second layer has output width 1 -> VPU multiply + sublane reduce (keeps
    # the MXU/extended slot free, accumulation stays f32).
    y = jnp.sum(h_t * w2_ref[...], axis=0, keepdims=True) + b2_ref[...]  # [1, TILE_B]
    o_ref[...] = y.astype(o_ref.dtype)


def _round_up(n, m):
    return ((n + m - 1) // m) * m


def direct_outcome_regression_forward(x, w1, b1, w2, b2, *, tile_b=1024,
                                      min_pallas_batch=128):
    """Forward pass of the (non-linear, unweighted) DirectOutcomeRegression MLP.

    x:  [B, d_in]  with d_in = n_confounder + n_cause
    w1: [H, d_in], b1: [H], w2: [1, H], b2: [1]   (PyTorch nn.Linear layout)
    Returns [B, 1].
    """
    B, d_in = x.shape
    H = w1.shape[0]

    # Tiny batches: fixed pallas_call / per-step overhead dominates -> let XLA fuse.
    if B < min_pallas_batch:
        h = jnp.maximum(x @ w1.T + b1[None, :], 0.0)
        return h @ w2.T + b2[None, :]

    # Keep tile a multiple of 128 (lane-dense out block) and no larger than needed.
    # Footprint is tiny even lane-padded (TILE_B x 128 lanes f32, double-buffered),
    # so it fits comfortably in v7x's smaller 64 MiB VMEM as well.
    tile_b = min(_round_up(tile_b, 128), _round_up(B, 128))
    grid = (pl.cdiv(B, tile_b),)

    # Advisory cost hint for XLA scheduling around this mem-bound custom call.
    itemsize = jnp.dtype(x.dtype).itemsize
    cost = pl.CostEstimate(
        flops=2 * B * d_in * H + 3 * B * H,
        transcendentals=0,
        bytes_accessed=(x.size + w1.size + b1.size + w2.size + b2.size + B) * itemsize,
    )

    out_t = pl.pallas_call(
        _mlp_kernel,
        out_shape=jax.ShapeDtypeStruct((1, B), x.dtype),
        grid=grid,
        in_specs=[
            pl.BlockSpec((tile_b, d_in), lambda i: (i, 0)),   # x: streamed batch tiles
            pl.BlockSpec((H, d_in), lambda i: (0, 0)),        # w1: resident
            pl.BlockSpec((H, 1), lambda i: (0, 0)),           # b1 (column)
            pl.BlockSpec((H, 1), lambda i: (0, 0)),           # w2 (column)
            pl.BlockSpec((1, 1), lambda i: (0, 0)),           # b2
        ],
        out_specs=pl.BlockSpec((1, tile_b), lambda i: (0, i)),
        compiler_params=pltpu.CompilerParams(
            dimension_semantics=("parallel",),                # megacore sharding on v7x
        ),
        cost_estimate=cost,
    )(x, w1, b1.reshape(H, 1), w2.reshape(H, 1), b2.reshape(1, 1))

    return out_t.reshape(B, 1)


def direct_outcome_regression_apply(input_mat, w1, b1, w2, b2, *, weighted=False, **kw):
    """Full module semantics: weighted=True slices off the last column as weights."""
    if not weighted:
        return direct_outcome_regression_forward(input_mat, w1, b1, w2, b2, **kw)
    x = input_mat[:, :-1]
    w = input_mat[:, -1:]
    return direct_outcome_regression_forward(x, w1, b1, w2, b2, **kw), w
    # TODO(synk): linear=True variant (single bias-free Linear) is a plain matmul;
    # not implemented as a separate Pallas kernel here.


def reference_forward(x, w1, b1, w2, b2):
    h = jnp.maximum(x @ w1.T + b1[None, :], 0.0)
    return h @ w2.T + b2[None, :]


if __name__ == "__main__":
    # Module config: n_confounder=4, n_cause=4 -> d_in=8, n_hidden=32, n_outcome=1.
    n_confounder, n_cause, n_hidden, n_outcome = 4, 4, 32, 1
    d_in = n_confounder + n_cause
    batch = 1024   # small, but enough to exercise the batch grid (4 tiles of 256)

    key = jax.random.PRNGKey(0)
    kx, kw1, kb1, kw2, kb2 = jax.random.split(key, 5)

    x = jax.random.normal(kx, (batch, d_in), dtype=jnp.float32)
    # Deterministic synthetic parameters in PyTorch nn.Linear layout / scale.
    bound1 = 1.0 / (d_in ** 0.5)
    bound2 = 1.0 / (n_hidden ** 0.5)
    w1 = jax.random.uniform(kw1, (n_hidden, d_in), jnp.float32, -bound1, bound1)
    b1 = jax.random.uniform(kb1, (n_hidden,), jnp.float32, -bound1, bound1)
    w2 = jax.random.uniform(kw2, (n_outcome, n_hidden), jnp.float32, -bound2, bound2)
    b2 = jax.random.uniform(kb2, (n_outcome,), jnp.float32, -bound2, bound2)

    ref = reference_forward(x, w1, b1, w2, b2)

    # Pallas path: batch grid of 4 tiles, lane-dense output.
    out = jax.block_until_ready(
        direct_outcome_regression_forward(x, w1, b1, w2, b2, tile_b=256))
    assert out.shape == (batch, 1)
    assert jnp.allclose(out, ref, atol=1e-5, rtol=1e-5)

    # Ragged batch (not a multiple of tile_b) -> partial edge blocks.
    out_odd = jax.block_until_ready(
        direct_outcome_regression_forward(x[:1000], w1, b1, w2, b2, tile_b=256))
    assert jnp.allclose(out_odd, ref[:1000], atol=1e-5, rtol=1e-5)

    # Tiny batch is gated to the fused XLA path (launch overhead would dominate).
    out_tiny = jax.block_until_ready(
        direct_outcome_regression_forward(x[:8], w1, b1, w2, b2))
    assert jnp.allclose(out_tiny, ref[:8], atol=1e-5, rtol=1e-5)

    # weighted=True branch: last input column is the sample weight.
    inp_w = jnp.concatenate([x, jnp.ones((batch, 1), jnp.float32)], axis=1)
    out_w, w_col = direct_outcome_regression_apply(
        inp_w, w1, b1, w2, b2, weighted=True, tile_b=256)
    out_w = jax.block_until_ready(out_w)
    assert out_w.shape == (batch, 1) and w_col.shape == (batch, 1)
    assert jnp.allclose(out_w, ref, atol=1e-5, rtol=1e-5)

    print("KERNEL_OK")
</pallas_src>

<mosaic_0001>
module attributes {stable_mosaic.version = 11 : i64} {
  func.func @_mlp_kernel(%arg0: i32, %arg1: memref<256x8xf32, #tpu.memory_space<vmem>>, %arg2: memref<32x8xf32, #tpu.memory_space<vmem>>, %arg3: memref<32x1xf32, #tpu.memory_space<vmem>>, %arg4: memref<32x1xf32, #tpu.memory_space<vmem>>, %arg5: memref<1x1xf32, #tpu.memory_space<vmem>>, %arg6: memref<1x256xf32, #tpu.memory_space<vmem>>) attributes {dimension_semantics = [#tpu.dimension_semantics<parallel>], iteration_bounds = array<i64: 4>, scalar_prefetch = 0 : i64, scratch_operands = 0 : i64, tpu.core_type = #tpu.core_type<tc>, window_params = [{transform_indices = @transform_0, window_bounds = array<i64: 256, 8>}, {pipeline_mode = #tpu.pipeline_mode<synchronous>, transform_indices = @transform_1, window_bounds = array<i64: 32, 8>}, {pipeline_mode = #tpu.pipeline_mode<synchronous>, transform_indices = @transform_2, window_bounds = array<i64: 32, 1>}, {pipeline_mode = #tpu.pipeline_mode<synchronous>, transform_indices = @transform_3, window_bounds = array<i64: 32, 1>}, {pipeline_mode = #tpu.pipeline_mode<synchronous>, transform_indices = @transform_4, window_bounds = array<i64: 1, 1>}, {transform_indices = @transform_5, window_bounds = array<i64: 1, 256>}]} {
    %c0 = arith.constant 0 : index
    %c0_0 = arith.constant 0 : index
    %0 = vector.load %arg2[%c0, %c0_0] : memref<32x8xf32, #tpu.memory_space<vmem>>, vector<32x8xf32>
    %c0_1 = arith.constant 0 : index
    %c0_2 = arith.constant 0 : index
    %1 = vector.load %arg1[%c0_1, %c0_2] : memref<256x8xf32, #tpu.memory_space<vmem>>, vector<256x8xf32>
    %cst = arith.constant dense<0.000000e+00> : vector<32x256xf32>
    %2 = tpu.matmul %0, %1, %cst {dimension_numbers = #tpu.dot_dimension_numbers<[1], [1], [0], [0], [0, 0, 1, 0], [], []>} : vector<32x8xf32>, vector<256x8xf32>, vector<32x256xf32> -> vector<32x256xf32>
    %c0_3 = arith.constant 0 : index
    %c0_4 = arith.constant 0 : index
    %3 = vector.load %arg3[%c0_3, %c0_4] : memref<32x1xf32, #tpu.memory_space<vmem>>, vector<32x1xf32>
    %4 = vector.broadcast %3 : vector<32x1xf32> to vector<32x256xf32>
    %5 = arith.addf %2, %4 : vector<32x256xf32>
    %cst_5 = arith.constant 0.000000e+00 : f32
    %6 = vector.broadcast %cst_5 : f32 to vector<32x256xf32>
    %7 = arith.maximumf %5, %6 : vector<32x256xf32>
    %c0_6 = arith.constant 0 : index
    %c0_7 = arith.constant 0 : index
    %8 = vector.load %arg4[%c0_6, %c0_7] : memref<32x1xf32, #tpu.memory_space<vmem>>, vector<32x1xf32>
    %9 = vector.broadcast %8 : vector<32x1xf32> to vector<32x256xf32>
    %10 = arith.mulf %7, %9 : vector<32x256xf32>
    %cst_8 = arith.constant dense<0.000000e+00> : vector<256xf32>
    %11 = vector.multi_reduction <add>, %10, %cst_8 [0] : vector<32x256xf32> to vector<256xf32>
    %12 = vector.shape_cast %11 : vector<256xf32> to vector<1x256xf32>
    %c0_9 = arith.constant 0 : index
    %c0_10 = arith.constant 0 : index
    %13 = vector.load %arg5[%c0_9, %c0_10] : memref<1x1xf32, #tpu.memory_space<vmem>>, vector<1x1xf32>
    %14 = vector.broadcast %13 : vector<1x1xf32> to vector<1x256xf32>
    %15 = arith.addf %12, %14 : vector<1x256xf32>
    %c0_11 = arith.constant 0 : index
    %c0_12 = arith.constant 0 : index
    %16 = vector.load %arg6[%c0_11, %c0_12] : memref<1x256xf32, #tpu.memory_space<vmem>>, vector<1x256xf32>
    tpu.vector_store %arg6[%c0_11, %c0_12], %15 {strides = array<i32>} : memref<1x256xf32, #tpu.memory_space<vmem>>, vector<1x256xf32>,
    return
  }
  func.func @transform_0(%arg0: i32) -> (i32, i32) {
    %c0_i32 = arith.constant 0 : i32
    %c0_i32_0 = arith.constant 0 : i32
    return %arg0, %c0_i32 : i32, i32
  }
  func.func @transform_1(%arg0: i32) -> (i32, i32) {
    %c0_i32 = arith.constant 0 : i32
    %c0_i32_0 = arith.constant 0 : i32
    %c0_i32_1 = arith.constant 0 : i32
    return %c0_i32, %c0_i32_0 : i32, i32
  }
  func.func @transform_2(%arg0: i32) -> (i32, i32) {
    %c0_i32 = arith.constant 0 : i32
    %c0_i32_0 = arith.constant 0 : i32
    %c0_i32_1 = arith.constant 0 : i32
    return %c0_i32, %c0_i32_0 : i32, i32
  }
  func.func @transform_3(%arg0: i32) -> (i32, i32) {
    %c0_i32 = arith.constant 0 : i32
    %c0_i32_0 = arith.constant 0 : i32
    %c0_i32_1 = arith.constant 0 : i32
    return %c0_i32, %c0_i32_0 : i32, i32
  }
  func.func @transform_4(%arg0: i32) -> (i32, i32) {
    %c0_i32 = arith.constant 0 : i32
    %c0_i32_0 = arith.constant 0 : i32
    %c0_i32_1 = arith.constant 0 : i32
    return %c0_i32, %c0_i32_0 : i32, i32
  }
  func.func @transform_5(%arg0: i32) -> (i32, i32) {
    %c0_i32 = arith.constant 0 : i32
    %c0_i32_0 = arith.constant 0 : i32
    return %c0_i32, %arg0 : i32, i32
  }
}

</mosaic_0001>

<llo_original>
// kernel: tpu_custom_call.1
$region0: #{tpu_custom_call.1}
  #allocation0 [shape = 'u32[]', space=smem, size = 0x4, offset = 0x4, fixed_abs, tag = 'smem constant byte address 0x4 - core index']
  #allocation1 [shape = 'u32[144,128]{1,0:T(1,128)}', space=vmem, size = 0x12000, scoped, tag = 'internal scratch']
  #allocation2 [shape = 'f32[1,1]{1,0:T(1,128)S(1)}', space=vmem, size = 0x200, scoped, tag = 'scoped memory for tpu_custom_call.1']
  %s0 = inlined_call_operand.vmem [shape: f32[1024,8], index: 0, kind: input, shape index: {}]
  %s1 = inlined_call_operand.vmem [shape: f32[32,8], index: 1, kind: input, shape index: {}]
  %s2 = inlined_call_operand.vmem [shape: f32[32,1], index: 2, kind: input, shape index: {}]
  %s3 = inlined_call_operand.vmem [shape: f32[32,1], index: 3, kind: input, shape index: {}]
  %s4 = inlined_call_operand.<no memory space> [shape: f32[1,1], index: 4, kind: input, shape index: {}]
  %s5 = inlined_call_operand.hbm [shape: f32[1,1024], index: 5, kind: output, shape index: {}]
  %s6 = sld [smem:[#allocation0]]
  $region53: #{tpu_custom_call.1} parent=0
    _
  %s8 = ssub.s32 1, %s6
  %s9 = scalar_select 0, %s8, %s6
  %v10 = vstv %s4
  %11 = vst [vmem:[#allocation2] sm:$0x1] %v10
  $region1: #{tpu_custom_call.1} parent=0
    #allocation3 [shape = 'u8[2048]{0}', space=vmem, size = 0x800, scoped, tag = 'output window, operand 0']
    #allocation4 [shape = 's32[2]{0}', space=sflag, size = 0x8, scoped, tag = 'scoped memory for tpu_custom_call.1']
    %12 = vsyncpa [#allocation4], 0
    %s13 = scalar_lea.sflag [#allocation4], 1
    %14 = vsyncpa %s13, 0
    loop: start=0, step=1, limit=6
    $region2: #{tpu_custom_call.1} parent=1 // loop_pre_header
      _
    $region3: #{tpu_custom_call.1} parent=1 // loop_header
      %s16 = sphi 0, %s20
      %p17 = scmp.ge.s32.totalorder %s16, 6
      %s26 = sphi 0, %s28
      %s29 = sphi 0, %s26
      %s30 = sphi 0, %s29
      %s46 = sphi 0, %s30
      %s50 = sphi 0, %s50
      %s52 = sphi 0, %s50
      %s53 = sphi 0, %s52
      %s67 = sphi 0, %s53
      %s71 = sphi 0, %s71
      %s73 = sphi 0, %s71
      %s74 = sphi 0, %s73
      %s88 = sphi 0, %s74
      %s92 = sphi 0, %s92
      %s94 = sphi 0, %s92
      %s95 = sphi 0, %s94
      %s109 = sphi 0, %s95
      %s113 = sphi 0, %s113
      %s115 = sphi 0, %s113
      %s116 = sphi 0, %s115
      %s130 = sphi 0, %s116
      %s136 = sphi 0, %s138
      %s139 = sphi 0, %s136
      %s140 = sphi 0, %s139
      %s156 = sphi 0, %s140
    $region4: #{tpu_custom_call.1} parent=1 // loop_header_branch
      %19 = sbr.rel (%p17) target = $region8
    $region5: #{tpu_custom_call.1} parent=1 // loop_body
      %s21 = ssub.s32 %s16, 1
      %s22 = ssub.s32 %s16, 2
      %s23 = sadd.s32 %s16, 1
      %s24 = ssub.s32 %s16, %s23
      %p25 = scmp.eq.s32.totalorder %s24, 0
      %s27 = sadd.s32 %s26, 1
      %s28 = scalar_select %p25, %s26, %s27
      %p31 = pneg %p25
      %p32 = scmp.eq.s32.totalorder %s16, 3
      %p33 = por %p31, %p32
      %p34 = scmp.ne.s32.totalorder %s26, %s29
      %p35 = scmp.eq.s32.totalorder %s16, 0
      %p36 = por %p34, %p35
      %p37 = scmp.ne.s32.totalorder %s26, %s29
      %p38 = scmp.eq.s32.totalorder %s21, 3
      %p39 = por %p37, %p38
      %p40 = scmp.ne.s32.totalorder %s29, %s30
      %p41 = scmp.eq.s32.totalorder %s21, 0
      %p42 = por %p40, %p41
      %p43 = scmp.ne.s32.totalorder %s29, %s30
      %p44 = scmp.eq.s32.totalorder %s22, 3
      %p45 = por %p43, %p44
      %p47 = scmp.ne.s32.totalorder %s30, %s46
      %p48 = scmp.eq.s32.totalorder %s22, 0
      %p49 = por %p47, %p48
      %s51 = sadd.s32 %s50, 1
      %p54 = scmp.eq.s32.totalorder %s16, 3
      %p55 = scmp.ne.s32.totalorder %s50, %s52
      %p56 = scmp.eq.s32.totalorder %s16, 0
      %p57 = por %p55, %p56
      %p58 = scmp.ne.s32.totalorder %s50, %s52
      %p59 = scmp.eq.s32.totalorder %s21, 3
      %p60 = por %p58, %p59
      %p61 = scmp.ne.s32.totalorder %s52, %s53
      %p62 = scmp.eq.s32.totalorder %s21, 0
      %p63 = por %p61, %p62
      %p64 = scmp.ne.s32.totalorder %s52, %s53
      %p65 = scmp.eq.s32.totalorder %s22, 3
      %p66 = por %p64, %p65
      %p68 = scmp.ne.s32.totalorder %s53, %s67
      %p69 = scmp.eq.s32.totalorder %s22, 0
      %p70 = por %p68, %p69
      %s72 = sadd.s32 %s71, 1
      %p75 = scmp.eq.s32.totalorder %s16, 3
      %p76 = scmp.ne.s32.totalorder %s71, %s73
      %p77 = scmp.eq.s32.totalorder %s16, 0
      %p78 = por %p76, %p77
      %p79 = scmp.ne.s32.totalorder %s71, %s73
      %p80 = scmp.eq.s32.totalorder %s21, 3
      %p81 = por %p79, %p80
      %p82 = scmp.ne.s32.totalorder %s73, %s74
      %p83 = scmp.eq.s32.totalorder %s21, 0
      %p84 = por %p82, %p83
      %p85 = scmp.ne.s32.totalorder %s73, %s74
      %p86 = scmp.eq.s32.totalorder %s22, 3
      %p87 = por %p85, %p86
      %p89 = scmp.ne.s32.totalorder %s74, %s88
      %p90 = scmp.eq.s32.totalorder %s22, 0
      %p91 = por %p89, %p90
      %s93 = sadd.s32 %s92, 1
      %p96 = scmp.eq.s32.totalorder %s16, 3
      %p97 = scmp.ne.s32.totalorder %s92, %s94
      %p98 = scmp.eq.s32.totalorder %s16, 0
      %p99 = por %p97, %p98
      %p100 = scmp.ne.s32.totalorder %s92, %s94
      %p101 = scmp.eq.s32.totalorder %s21, 3
      %p102 = por %p100, %p101
      %p103 = scmp.ne.s32.totalorder %s94, %s95
      %p104 = scmp.eq.s32.totalorder %s21, 0
      %p105 = por %p103, %p104
      %p106 = scmp.ne.s32.totalorder %s94, %s95
      %p107 = scmp.eq.s32.totalorder %s22, 3
      %p108 = por %p106, %p107
      %p110 = scmp.ne.s32.totalorder %s95, %s109
      %p111 = scmp.eq.s32.totalorder %s22, 0
      %p112 = por %p110, %p111
      %s114 = sadd.s32 %s113, 1
      %p117 = scmp.eq.s32.totalorder %s16, 3
      %p118 = scmp.ne.s32.totalorder %s113, %s115
      %p119 = scmp.eq.s32.totalorder %s16, 0
      %p120 = por %p118, %p119
      %p121 = scmp.ne.s32.totalorder %s113, %s115
      %p122 = scmp.eq.s32.totalorder %s21, 3
      %p123 = por %p121, %p122
      %p124 = scmp.ne.s32.totalorder %s115, %s116
      %p125 = scmp.eq.s32.totalorder %s21, 0
      %p126 = por %p124, %p125
      %p127 = scmp.ne.s32.totalorder %s115, %s116
      %p128 = scmp.eq.s32.totalorder %s22, 3
      %p129 = por %p127, %p128
      %p131 = scmp.ne.s32.totalorder %s116, %s130
      %p132 = scmp.eq.s32.totalorder %s22, 0
      %p133 = por %p131, %p132
      %s134 = ssub.s32 %s16, %s23
      %p135 = scmp.eq.s32.totalorder %s134, 0
      %s137 = sadd.s32 %s136, 1
      %s138 = scalar_select %p135, %s136, %s137
      %p141 = pneg %p135
      %p142 = scmp.eq.s32.totalorder %s16, 3
      %p143 = por %p141, %p142
      %p144 = scmp.ne.s32.totalorder %s136, %s139
      %p145 = scmp.eq.s32.totalorder %s16, 0
      %p146 = por %p144, %p145
      %p147 = scmp.ne.s32.totalorder %s136, %s139
      %p148 = scmp.eq.s32.totalorder %s21, 3
      %p149 = por %p147, %p148
      %p150 = scmp.ne.s32.totalorder %s139, %s140
      %p151 = scmp.eq.s32.totalorder %s21, 0
      %p152 = por %p150, %p151
      %p153 = scmp.ne.s32.totalorder %s139, %s140
      %p154 = scmp.eq.s32.totalorder %s22, 3
      %p155 = por %p153, %p154
      %p157 = scmp.ne.s32.totalorder %s140, %s156
      %p158 = scmp.eq.s32.totalorder %s22, 0
      %p159 = por %p157, %p158
      %p160 = scmp.le.s32.totalorder 1, %s16
      %p161 = scmp.lt.s32.totalorder %s16, 5
      %p162 = pnand %p160, %p161
      %p163 = pneg %p162
      // Predicated region
      $region9: #{tpu_custom_call.1} parent=5 // pred_check
        _
      $region10: #{tpu_custom_call.1} parent=5 // pred_check_branch
        %165 = sbr.rel (%p162) target = $region12
      $region11: #{tpu_custom_call.1} parent=5 // pred_region
        %s166 = ssub.s32 %s16, 1
        // Predicated region
        $region13: #{tpu_custom_call.1} parent=11 // pred_check
          %p167 = pneg %p63
        $region14: #{tpu_custom_call.1} parent=11 // pred_check_branch
          %169 = sbr.rel (%p167) target = $region16
        $region15: #{tpu_custom_call.1} parent=11 // pred_region
          _
        $region16: #{tpu_custom_call.1} parent=11 // pred_fallthru
          _
        // Predicated region
        $region17: #{tpu_custom_call.1} parent=11 // pred_check
          %p170 = pneg %p84
        $region18: #{tpu_custom_call.1} parent=11 // pred_check_branch
          %172 = sbr.rel (%p170) target = $region20
        $region19: #{tpu_custom_call.1} parent=11 // pred_region
          _
        $region20: #{tpu_custom_call.1} parent=11 // pred_fallthru
          _
        // Predicated region
        $region21: #{tpu_custom_call.1} parent=11 // pred_check
          %p173 = pneg %p105
        $region22: #{tpu_custom_call.1} parent=11 // pred_check_branch
          %175 = sbr.rel (%p173) target = $region24
        $region23: #{tpu_custom_call.1} parent=11 // pred_region
          _
        $region24: #{tpu_custom_call.1} parent=11 // pred_fallthru
          _
        // Predicated region
        $region25: #{tpu_custom_call.1} parent=11 // pred_check
          %p176 = pneg %p126
        $region26: #{tpu_custom_call.1} parent=11 // pred_check_branch
          %178 = sbr.rel (%p176) target = $region28
        $region27: #{tpu_custom_call.1} parent=11 // pred_region
          _
        $region28: #{tpu_custom_call.1} parent=11 // pred_fallthru
          _
      $region12: #{tpu_custom_call.1} parent=5 // pred_fallthru
        _
      %p179 = scmp.lt.s32.totalorder %s16, 4
      // Predicated region
      $region29: #{tpu_custom_call.1} parent=5 // pred_check
        %p180 = pneg %p179
      $region30: #{tpu_custom_call.1} parent=5 // pred_check_branch
        %182 = sbr.rel (%p180) target = $region32
      $region31: #{tpu_custom_call.1} parent=5 // pred_region
        // Predicated region
        $region33: #{tpu_custom_call.1} parent=31 // pred_check
          %p183 = pneg %p36
        $region34: #{tpu_custom_call.1} parent=31 // pred_check_branch
          %185 = sbr.rel (%p183) target = $region36
        $region35: #{tpu_custom_call.1} parent=31 // pred_region
          %s186 = smul.u32 32, %s16
          %p187 = scmp.lt.s32.totalorder %s186, 127
          %s188 = scalar_select %p187, %s186, 127
          %s189 = smul.addr %s188, 8
          %s190 = scalar_lea.vmem %s0, %s189
          %s191 = smul.u32 32, %s16
        $region36: #{tpu_custom_call.1} parent=31 // pred_fallthru
          _
      $region32: #{tpu_custom_call.1} parent=5 // pred_fallthru
        _
      %p192 = scmp.le.s32.totalorder 1, %s16
      %p193 = scmp.lt.s32.totalorder %s16, 5
      %p194 = pnand %p192, %p193
      %p195 = pneg %p194
      // Predicated region
      $region37: #{tpu_custom_call.1} parent=5 // pred_check
        _
      $region38: #{tpu_custom_call.1} parent=5 // pred_check_branch
        %197 = sbr.rel (%p194) target = $region40
      $region39: #{tpu_custom_call.1} parent=5 // pred_region
        %s198 = ssub.s32 %s16, 1
        %s199 = smul.u32 32, %s21
        %p200 = scmp.lt.s32.totalorder %s199, 127
        %s201 = scalar_select %p200, %s199, 127
        %s202 = smul.addr %s201, 8
        %s203 = scalar_lea.vmem %s0, %s202
        %p204 = pneg %p42
        %p205 = pneg %p39
        %p206 = pneg %p63
        %p207 = pneg %p60
        %p208 = pneg %p84
        %p209 = pneg %p81
        %p210 = pneg %p105
        %p211 = pneg %p102
        %p212 = pneg %p126
        %p213 = pneg %p123
        %p214 = pneg %p152
        %p215 = pneg %p149
        %s216 = sand.u32 %s139, 1
        %s217 = scalar_lea.sflag [#allocation4], %s216
        %s218 = sand.u32 %s139, 1
        %s219 = smul.addr %s218, 2
        %s220 = scalar_lea.vmem [#allocation3], %s219
        %s221 = smul.u32 32, %s21
        %p222 = scmp.lt.s32.totalorder %s221, 127
        %s223 = scalar_select %p222, %s221, 127
        %s224 = smul.addr %s223, 8
        %s225 = scalar_lea.vmem %s0, %s224
        %s226 = smul.u32 32, %s21
        %s227 = smul.u32 2, %s21
        %v228 = vld [vmem:[%s1] sm:$0xff]
        %v229 = vld [vmem:[%s1 + $0x8] sm:$0xff]
        %v230 = vld [vmem:[%s1 + $0x10] sm:$0xff]
        %v231 = vld [vmem:[%s1 + $0x18] sm:$0xff]
        %v232 = vld [vmem:[%s225] sm:$0xff]
        %v233 = vld [vmem:[%s225 + $0x8] sm:$0xff]
        %v234 = vld [vmem:[%s225 + $0x10] sm:$0xff]
        %v235 = vld [vmem:[%s225 + $0x18] sm:$0xff]
        %v236 = vld [vmem:[%s225 + $0x20] sm:$0xff]
        %v237 = vld [vmem:[%s225 + $0x28] sm:$0xff]
        %v238 = vld [vmem:[%s225 + $0x30] sm:$0xff]
        %v239 = vld [vmem:[%s225 + $0x38] sm:$0xff]
        %v240 = vld [vmem:[%s225 + $0x40] sm:$0xff]
        %v241 = vld [vmem:[%s225 + $0x48] sm:$0xff]
        %v242 = vld [vmem:[%s225 + $0x50] sm:$0xff]
        %v243 = vld [vmem:[%s225 + $0x58] sm:$0xff]
        %v244 = vld [vmem:[%s225 + $0x60] sm:$0xff]
        %v245 = vld [vmem:[%s225 + $0x68] sm:$0xff]
        %v246 = vld [vmem:[%s225 + $0x70] sm:$0xff]
        %v247 = vld [vmem:[%s225 + $0x78] sm:$0xff]
        %v248 = vld [vmem:[%s225 + $0x80] sm:$0xff]
        %v249 = vld [vmem:[%s225 + $0x88] sm:$0xff]
        %v250 = vld [vmem:[%s225 + $0x90] sm:$0xff]
        %v251 = vld [vmem:[%s225 + $0x98] sm:$0xff]
        %v252 = vld [vmem:[%s225 + $0xa0] sm:$0xff]
        %v253 = vld [vmem:[%s225 + $0xa8] sm:$0xff]
        %v254 = vld [vmem:[%s225 + $0xb0] sm:$0xff]
        %v255 = vld [vmem:[%s225 + $0xb8] sm:$0xff]
        %v256 = vld [vmem:[%s225 + $0xc0] sm:$0xff]
        %v257 = vld [vmem:[%s225 + $0xc8] sm:$0xff]
        %v258 = vld [vmem:[%s225 + $0xd0] sm:$0xff]
        %v259 = vld [vmem:[%s225 + $0xd8] sm:$0xff]
        %v260 = vld [vmem:[%s225 + $0xe0] sm:$0xff]
        %v261 = vld [vmem:[%s225 + $0xe8] sm:$0xff]
        %v262 = vld [vmem:[%s225 + $0xf0] sm:$0xff]
        %v263 = vld [vmem:[%s225 + $0xf8] sm:$0xff]
        %v264 = vld [vmem:[%s2] sm:$0xff]
        %v265 = vld [vmem:[%s2 + $0x8] sm:$0xff]
        %v266 = vld [vmem:[%s2 + $0x10] sm:$0xff]
        %v267 = vld [vmem:[%s2 + $0x18] sm:$0xff]
        %269 = vset.pattern.permute.xlu0 0
        %270 = vperm.xlu0 %269, %v264
        %v271 = vpop.permute.xlu0 %270
        %274 = vset.pattern.permute.xlu0 0
        %275 = vperm.xlu0 %274, %v265
        %v276 = vpop.permute.xlu0 %275
        %279 = vset.pattern.permute.xlu0 0
        %280 = vperm.xlu0 %279, %v266
        %v281 = vpop.permute.xlu0 %280
        %284 = vset.pattern.permute.xlu0 0
        %285 = vperm.xlu0 %284, %v267
        %v286 = vpop.permute.xlu0 %285
        %vm288 = vcmask 64512
        %v290 = vsel %vm288, %v228, 0
        %v293 = vsel %vm288, %v229, 0
        %v296 = vsel %vm288, %v230, 0
        %v299 = vsel %vm288, %v231, 0
        %v302 = vsel %vm288, %v232, 0
        %v305 = vsel %vm288, %v233, 0
        %v308 = vsel %vm288, %v234, 0
        %v311 = vsel %vm288, %v235, 0
        %v314 = vsel %vm288, %v236, 0
        %v317 = vsel %vm288, %v237, 0
        %v320 = vsel %vm288, %v238, 0
        %v323 = vsel %vm288, %v239, 0
        %v326 = vsel %vm288, %v240, 0
        %v329 = vsel %vm288, %v241, 0
        %v332 = vsel %vm288, %v242, 0
        %v335 = vsel %vm288, %v243, 0
        %v338 = vsel %vm288, %v244, 0
        %v341 = vsel %vm288, %v245, 0
        %v344 = vsel %vm288, %v246, 0
        %v347 = vsel %vm288, %v247, 0
        %v350 = vsel %vm288, %v248, 0
        %v353 = vsel %vm288, %v249, 0
        %v356 = vsel %vm288, %v250, 0
        %v359 = vsel %vm288, %v251, 0
        %v362 = vsel %vm288, %v252, 0
        %v365 = vsel %vm288, %v253, 0
        %v368 = vsel %vm288, %v254, 0
        %v371 = vsel %vm288, %v255, 0
        %v374 = vsel %vm288, %v256, 0
        %v377 = vsel %vm288, %v257, 0
        %v380 = vsel %vm288, %v258, 0
        %v383 = vsel %vm288, %v259, 0
        %v386 = vsel %vm288, %v260, 0
        %v389 = vsel %vm288, %v261, 0
        %v392 = vsel %vm288, %v262, 0
        %v395 = vsel %vm288, %v263, 0
        %397 = vmatprep.subr.mxu0 0.0
        %398 = vmatpush1.xpose.msra.mxu0 %v302
        %399 = vmatprep.subr.mxu0 0.0
        %400 = vmatpush1.xpose.msra.mxu0 %v305
        %401 = vmatprep.subr.mxu0 0.0
        %402 = vmatpush1.xpose.msra.mxu0 %v308
        %403 = vmatprep.subr.mxu0 0.0
        %404 = vmatpush1.xpose.msra.mxu0 %v311
        %405 = vmatprep.subr.mxu0 0.0
        %406 = vmatpush1.xpose.msra.mxu0 %v314
        %407 = vmatprep.subr.mxu0 0.0
        %408 = vmatpush1.xpose.msra.mxu0 %v317
        %409 = vmatprep.subr.mxu0 0.0
        %410 = vmatpush1.xpose.msra.mxu0 %v320
        %411 = vmatprep.subr.mxu0 0.0
        %412 = vmatpush1.xpose.msra.mxu0 %v323
        %413 = vmatprep.subr.mxu0 0.0
        %414 = vmatpush1.xpose.msra.mxu0 %v326
        %415 = vmatprep.subr.mxu0 0.0
        %416 = vmatpush1.xpose.msra.mxu0 %v329
        %417 = vmatprep.subr.mxu0 0.0
        %418 = vmatpush1.xpose.msra.mxu0 %v332
        %419 = vmatprep.subr.mxu0 0.0
        %420 = vmatpush1.xpose.msra.mxu0 %v335
        %421 = vmatprep.subr.mxu0 0.0
        %422 = vmatpush1.xpose.msra.mxu0 %v338
        %423 = vmatprep.subr.mxu0 0.0
        %424 = vmatpush1.xpose.msra.mxu0 %v341
        %425 = vmatprep.subr.mxu0 0.0
        %426 = vmatpush1.xpose.msra.mxu0 %v344
        %427 = vmatprep.subr.mxu0 0.0
        %428 = vmatpush1.xpose.msra.mxu0 %v347
        %429 = vmatprep.subr.mxu0 0.0
        %430 = vmatpush1.xpose.msra.mxu0 %v350
        %431 = vmatprep.subr.mxu0 0.0
        %432 = vmatpush1.xpose.msra.mxu0 %v353
        %433 = vmatprep.subr.mxu0 0.0
        %434 = vmatpush1.xpose.msra.mxu0 %v356
        %435 = vmatprep.subr.mxu0 0.0
        %436 = vmatpush1.xpose.msra.mxu0 %v359
        %437 = vmatprep.subr.mxu0 0.0
        %438 = vmatpush1.xpose.msra.mxu0 %v362
        %439 = vmatprep.subr.mxu0 0.0
        %440 = vmatpush1.xpose.msra.mxu0 %v365
        %441 = vmatprep.subr.mxu0 0.0
        %442 = vmatpush1.xpose.msra.mxu0 %v368
        %443 = vmatprep.subr.mxu0 0.0
        %444 = vmatpush1.xpose.msra.mxu0 %v371
        %445 = vmatprep.subr.mxu0 0.0
        %446 = vmatpush1.xpose.msra.mxu0 %v374
        %447 = vmatprep.subr.mxu0 0.0
        %448 = vmatpush1.xpose.msra.mxu0 %v377
        %449 = vmatprep.subr.mxu0 0.0
        %450 = vmatpush1.xpose.msra.mxu0 %v380
        %451 = vmatprep.subr.mxu0 0.0
        %452 = vmatpush1.xpose.msra.mxu0 %v383
        %453 = vmatprep.subr.mxu0 0.0
        %454 = vmatpush1.xpose.msra.mxu0 %v386
        %455 = vmatprep.subr.mxu0 0.0
        %456 = vmatpush1.xpose.msra.mxu0 %v389
        %457 = vmatprep.subr.mxu0 0.0
        %458 = vmatpush1.xpose.msra.mxu0 %v392
        %459 = vmatprep.subr.mxu0 0.0
        %460 = vmatpush1.xpose.msra.mxu0 %v395
        %461 = vmatprep.mubr.f32.mxu0 0.0
        %462 = vmatmul.mubr.f32.gmra.mrb[0].mxu0 %v290
        %v463 = vpop.f32.mrb[0].mxu0
        %v464 = vadd.f32 %v271, %v463
        %v465 = vpop.f32.mrb[0].mxu0
        %v466 = vadd.f32 %v271, %v465
        %467 = vmatprep.mubr.f32.mxu0 0.0
        %468 = vmatmul.mubr.f32.gmra.mrb[0].mxu0 %v293
        %v469 = vpop.f32.mrb[0].mxu0
        %v470 = vadd.f32 %v276, %v469
        %v471 = vpop.f32.mrb[0].mxu0
        %v472 = vadd.f32 %v276, %v471
        %473 = vmatprep.mubr.f32.mxu0 0.0
        %474 = vmatmul.mubr.f32.gmra.mrb[0].mxu0 %v296
        %v475 = vpop.f32.mrb[0].mxu0
        %v476 = vadd.f32 %v281, %v475
        %v477 = vpop.f32.mrb[0].mxu0
        %v478 = vadd.f32 %v281, %v477
        %479 = vmatprep.mubr.f32.mxu0 0.0
        %480 = vmatmul.mubr.f32.gmra.mrb[0].mxu0 %v299
        %v481 = vpop.f32.mrb[0].mxu0
        %v482 = vadd.f32 %v286, %v481
        %v483 = vpop.f32.mrb[0].mxu0
        %v484 = vadd.f32 %v286, %v483
        %485 = vdwg.mxu0
        %v486 = vmax.f32 %v464, 0.0
        %v487 = vmax.f32 %v466, 0.0
        %v488 = vmax.f32 %v470, 0.0
        %v489 = vmax.f32 %v472, 0.0
        %v490 = vmax.f32 %v476, 0.0
        %v491 = vmax.f32 %v478, 0.0
        %v492 = vmax.f32 %v482, 0.0
        %v493 = vmax.f32 %v484, 0.0
        %v494 = vld [vmem:[%s3] sm:$0xff]
        %v495 = vld [vmem:[%s3 + $0x8] sm:$0xff]
        %v496 = vld [vmem:[%s3 + $0x10] sm:$0xff]
        %v497 = vld [vmem:[%s3 + $0x18] sm:$0xff]
        %499 = vset.pattern.permute.xlu0 0
        %500 = vperm.xlu0 %499, %v494
        %v501 = vpop.permute.xlu0 %500
        %504 = vset.pattern.permute.xlu0 0
        %505 = vperm.xlu0 %504, %v495
        %v506 = vpop.permute.xlu0 %505
        %509 = vset.pattern.permute.xlu0 0
        %510 = vperm.xlu0 %509, %v496
        %v511 = vpop.permute.xlu0 %510
        %514 = vset.pattern.permute.xlu0 0
        %515 = vperm.xlu0 %514, %v497
        %v516 = vpop.permute.xlu0 %515
        %v518 = vmul.f32 %v486, %v501
        %v519 = vmul.f32 %v487, %v501
        %v520 = vmul.f32 %v488, %v506
        %v521 = vmul.f32 %v489, %v506
        %v522 = vmul.f32 %v490, %v511
        %v523 = vmul.f32 %v491, %v511
        %v524 = vmul.f32 %v492, %v516
        %v525 = vmul.f32 %v493, %v516
        %v526 = vadd.f32 %v518, %v520
        %v527 = vadd.f32 %v526, %v522
        %v528 = vadd.f32 %v527, %v524
        %v529 = vrot.slane %v528, 4
        %v530 = vadd.f32 %v528, %v529
        %v531 = vrot.slane %v530, 2
        %v532 = vadd.f32 %v530, %v531
        %v533 = vrot.slane %v532, 1
        %v534 = vadd.f32 %v532, %v533
        %v535 = vadd.f32 %v519, %v521
        %v536 = vadd.f32 %v535, %v523
        %v537 = vadd.f32 %v536, %v525
        %v538 = vrot.slane %v537, 4
        %v539 = vadd.f32 %v537, %v538
        %v540 = vrot.slane %v539, 2
        %v541 = vadd.f32 %v539, %v540
        %v542 = vrot.slane %v541, 1
        %v543 = vadd.f32 %v541, %v542
        %v544 = vld [vmem:[#allocation2] sm:$0x1]
        %546 = vset.pattern.permute.xlu0 0
        %547 = vperm.xlu0 %546, %v544
        %v548 = vpop.permute.xlu0 %547
        %v550 = vlaneseq
        %v551 = vshrl.u32 %v550, 7
        %v552 = vsub.s32 0, %v551
        %v553 = vrot.slane %v548, %v552
        %v554 = vadd.f32 %v534, %v553
        %v555 = vadd.f32 %v543, %v553
        %v558 = vcombine.low %v554, %v555
        %v560 = vunpack.c.l.s4 1966171168
        %v561 = vunpack.c.0.s8 %v560
        %v562 = vlaneseq
        %v563 = vshrl.u32 %v562, 7
        %v564 = vsub.s32 %v561, %v563
        %v565 = vrot.slane %v558, %v564
        %v567 = vunpack.c.l.s4 1966171168
        %v568 = vunpack.c.0.s8 %v567
        %v569 = vlaneseq
        %v570 = vshrl.u32 %v569, 7
        %v571 = vsub.s32 %v568, %v570
        %v572 = vrot.slane %v565, %v571
        %v574 = vlaneseq
        %vm575 = vcmp.ge.s32.totalorder %v574, 0
        %vm576 = vcmp.lt.s32.totalorder %v574, 256
        %vm577 = vmand %vm575, %vm576
        %578 = vst.msk [vmem:[%s220] sm:$0x3] %vm577, %v572
        %s579 = sand.u32 %s139, 1
        %s580 = scalar_lea.sflag [#allocation4], %s579
        %s581 = sand.u32 %s139, 1
        %s582 = smul.addr %s581, 2
        %s583 = scalar_lea.vmem [#allocation3], %s582
        // Predicated region
        $region41: #{tpu_custom_call.1} parent=39 // pred_check
          %p584 = pneg %p149
        $region42: #{tpu_custom_call.1} parent=39 // pred_check_branch
          %586 = sbr.rel (%p584) target = $region44
        $region43: #{tpu_custom_call.1} parent=39 // pred_region
          %s587 = smul.u32 2, %s21
          %s589 = ssub.s32 32, 32
          %590 = vsyncadd %s580, %s589
          %s591 = smul.addr %s587, 16
          %s592 = scalar_lea.hbm %s5, %s591
          %s594 = sshll.u32 %s583, 4
          %s595 = int_to_ptr.vmem [resolvable:$true] %s594
          %597 = dma.vmem_to_hbm [thread:$0]  %s595, 32, %s592, %s580
        $region44: #{tpu_custom_call.1} parent=39 // pred_fallthru
          _
      $region40: #{tpu_custom_call.1} parent=5 // pred_fallthru
        _
      %p598 = scmp.le.s32.totalorder 2, %s16
      // Predicated region
      $region45: #{tpu_custom_call.1} parent=5 // pred_check
        %p599 = pneg %p598
      $region46: #{tpu_custom_call.1} parent=5 // pred_check_branch
        %601 = sbr.rel (%p599) target = $region48
      $region47: #{tpu_custom_call.1} parent=5 // pred_region
        %s602 = ssub.s32 %s16, 2
        // Predicated region
        $region49: #{tpu_custom_call.1} parent=47 // pred_check
          %p603 = pneg %p155
        $region50: #{tpu_custom_call.1} parent=47 // pred_check_branch
          %605 = sbr.rel (%p603) target = $region52
        $region51: #{tpu_custom_call.1} parent=47 // pred_region
          %s606 = sand.u32 %s140, 1
          %s607 = scalar_lea.sflag [#allocation4], %s606
          %s608 = sand.u32 %s140, 1
          %s609 = smul.addr %s608, 2
          %s610 = scalar_lea.vmem [#allocation3], %s609
          %611 = dma.done %s607, 32
        $region52: #{tpu_custom_call.1} parent=47 // pred_fallthru
          _
      $region48: #{tpu_custom_call.1} parent=5 // pred_fallthru
        _
    $region6: #{tpu_custom_call.1} parent=1 // loop_footer
      %s20 = sadd.s32 1, %s16
    $region7: #{tpu_custom_call.1} parent=1 // loop_footer_branch
      %15 = sbr.rel target = $region3
    $region8: #{tpu_custom_call.1} parent=1 // loop_exit
      _
    %612 = vsyncpa [#allocation4], 1
    %s613 = scalar_lea.sflag [#allocation4], 1
    %614 = vsyncpa %s613, 1

</llo_original>
